<compile_context>
chip_gen: v6e
topology: v6e:2x2x1
jax: 0.10.0
libtpu: 0.0.40
codegen_flags: <defaults>
</compile_context>

<pallas_src>
import functools

import jax
import jax.numpy as jnp
from jax.experimental import pallas as pl
from jax.experimental.pallas import tpu as pltpu


_LANES = 128
_SUBLANES = 8
_MAX_TILE_ROWS = 512  # 512 * 128 * 4 B = 256 KiB per input per grid step


def _round_up(x, m):
    return (x + m - 1) // m * m


def _mse_sum_kernel(p_ref, t_ref, out_ref, *, inv_n):
    """Accumulate sum((p - t)^2) across the grid; scale by 1/n at the end.

    p_ref / t_ref: (TILE_ROWS, 128) lane-dense f32 VMEM tiles (zero-padded
    beyond the real B*3 elements, so pads contribute 0 to the sum).
    out_ref: (1, 1) f32 resident accumulator (same block every grid step).
    """
    i = pl.program_id(0)

    @pl.when(i == 0)
    def _init():
        out_ref[...] = jnp.zeros_like(out_ref)

    d = p_ref[...] - t_ref[...]
    out_ref[...] += jnp.sum(d * d, axis=(0, 1), keepdims=True)

    @pl.when(i == pl.num_programs(0) - 1)
    def _finalize():
        out_ref[...] = out_ref[...] * inv_n


def just_last_node_position_loss(pred, target, graph_length):
    """Pallas equivalent of JustLastNodePositionLoss.forward (MSE on last node)."""
    total = pred.size
    assert total % (graph_length * 3) == 0
    b = total // (graph_length * 3)

    # Pre-slice ONLY the last node per graph (torch: pred.view(-1, G, 3)[:, -1, :]).
    lp = pred.reshape(b, graph_length, 3)[:, -1, :].astype(jnp.float32)
    lt = target.reshape(b, graph_length, 3)[:, -1, :].astype(jnp.float32)

    n = b * 3  # true element count for the mean (torch MSELoss 'mean')
    lp = lp.reshape(-1)
    lt = lt.reshape(-1)

    # Lane-dense layout: rows of 128 lanes, zero-padded so the grid tiling
    # divides evenly (zero pads add 0 to the squared-error sum).
    rows = max(_SUBLANES, _round_up(pl.cdiv(n, _LANES), _SUBLANES))
    tile_rows = min(_MAX_TILE_ROWS, rows)
    rows = _round_up(rows, tile_rows)
    padded_n = rows * _LANES
    lp = jnp.pad(lp, (0, padded_n - n)).reshape(rows, _LANES)
    lt = jnp.pad(lt, (0, padded_n - n)).reshape(rows, _LANES)

    grid = (rows // tile_rows,)
    out = pl.pallas_call(
        functools.partial(_mse_sum_kernel, inv_n=1.0 / float(n)),
        out_shape=jax.ShapeDtypeStruct((1, 1), jnp.float32),
        grid=grid,
        in_specs=[
            pl.BlockSpec((tile_rows, _LANES), lambda i: (i, 0)),
            pl.BlockSpec((tile_rows, _LANES), lambda i: (i, 0)),
        ],
        out_specs=pl.BlockSpec((1, 1), lambda i: (0, 0)),
        compiler_params=pltpu.CompilerParams(
            dimension_semantics=("arbitrary",)),
    )(lp, lt)
    return out[0, 0]


if __name__ == "__main__":
    batch_size = 4
    graph_length = 8

    key = jax.random.PRNGKey(0)
    k_pred, k_target = jax.random.split(key)
    # Inputs as the torch module would receive them (any shape that .view's
    # to (-1, graph_length, 3)); here (B, graph_length * 3).
    pred = jax.random.normal(k_pred, (batch_size, graph_length * 3), dtype=jnp.float32)
    target = jax.random.normal(k_target, (batch_size, graph_length * 3), dtype=jnp.float32)

    loss = just_last_node_position_loss(pred, target, graph_length)
    loss = jax.block_until_ready(loss)

    # reference (pure JAX) check
    p3 = pred.reshape(-1, graph_length, 3)
    t3 = target.reshape(-1, graph_length, 3)
    ref = jnp.mean((p3[:, -1, :] - t3[:, -1, :]) ** 2)
    assert jnp.allclose(loss, ref, rtol=1e-5, atol=1e-6), (loss, ref)

    print("KERNEL_OK")
</pallas_src>

<mosaic_0001>
module attributes {stable_mosaic.version = 11 : i64} {
  func.func @_mse_sum_kernel(%arg0: i32, %arg1: memref<8x128xf32, #tpu.memory_space<vmem>>, %arg2: memref<8x128xf32, #tpu.memory_space<vmem>>, %arg3: memref<1x1xf32, #tpu.memory_space<vmem>>) attributes {dimension_semantics = [#tpu.dimension_semantics<arbitrary>], iteration_bounds = array<i64: 1>, scalar_prefetch = 0 : i64, scratch_operands = 0 : i64, tpu.core_type = #tpu.core_type<tc>, window_params = [{transform_indices = @transform_0, window_bounds = array<i64: 8, 128>}, {transform_indices = @transform_1, window_bounds = array<i64: 8, 128>}, {pipeline_mode = #tpu.pipeline_mode<synchronous>, transform_indices = @transform_2, window_bounds = array<i64: 1, 1>}]} {
    %c0_i32 = arith.constant 0 : i32
    %0 = arith.cmpi eq, %arg0, %c0_i32 : i32
    %1 = arith.extui %0 : i1 to i32
    %c0_i32_0 = arith.constant 0 : i32
    %2 = arith.cmpi ne, %1, %c0_i32_0 : i32
    scf.if %2 {
      %cst_10 = arith.constant 0.000000e+00 : f32
      %18 = vector.broadcast %cst_10 : f32 to vector<1x1xf32>
      %c0_11 = arith.constant 0 : index
      %c0_12 = arith.constant 0 : index
      %19 = vector.load %arg3[%c0_11, %c0_12] : memref<1x1xf32, #tpu.memory_space<vmem>>, vector<1x1xf32>
      tpu.vector_store %arg3[%c0_11, %c0_12], %18 {strides = array<i32>} : memref<1x1xf32, #tpu.memory_space<vmem>>, vector<1x1xf32>,
    } else {
    }
    %c0 = arith.constant 0 : index
    %c0_1 = arith.constant 0 : index
    %3 = vector.load %arg1[%c0, %c0_1] : memref<8x128xf32, #tpu.memory_space<vmem>>, vector<8x128xf32>
    %c0_2 = arith.constant 0 : index
    %c0_3 = arith.constant 0 : index
    %4 = vector.load %arg2[%c0_2, %c0_3] : memref<8x128xf32, #tpu.memory_space<vmem>>, vector<8x128xf32>
    %5 = arith.subf %3, %4 : vector<8x128xf32>
    %c0_4 = arith.constant 0 : index
    %c0_5 = arith.constant 0 : index
    %6 = vector.load %arg3[%c0_4, %c0_5] : memref<1x1xf32, #tpu.memory_space<vmem>>, vector<1x1xf32>
    %7 = arith.mulf %5, %5 : vector<8x128xf32>
    %8 = vector.shape_cast %7 : vector<8x128xf32> to vector<1x8x128xf32>
    %cst = arith.constant dense<0.000000e+00> : vector<1xf32>
    %9 = vector.multi_reduction <add>, %8, %cst [1, 2] : vector<1x8x128xf32> to vector<1xf32>
    %10 = vector.shape_cast %9 : vector<1xf32> to vector<1x1x1xf32>
    %11 = vector.extract %10[0, 0, 0] : f32 from vector<1x1x1xf32>
    %12 = vector.broadcast %11 : f32 to vector<1x1xf32>
    %13 = arith.addf %6, %12 : vector<1x1xf32>
    %c0_6 = arith.constant 0 : index
    %c0_7 = arith.constant 0 : index
    %14 = vector.load %arg3[%c0_6, %c0_7] : memref<1x1xf32, #tpu.memory_space<vmem>>, vector<1x1xf32>
    tpu.vector_store %arg3[%c0_6, %c0_7], %13 {strides = array<i32>} : memref<1x1xf32, #tpu.memory_space<vmem>>, vector<1x1xf32>,
    %c0_i32_8 = arith.constant 0 : i32
    %15 = arith.cmpi eq, %arg0, %c0_i32_8 : i32
    %16 = arith.extui %15 : i1 to i32
    %c0_i32_9 = arith.constant 0 : i32
    %17 = arith.cmpi ne, %16, %c0_i32_9 : i32
    scf.if %17 {
      %c0_10 = arith.constant 0 : index
      %c0_11 = arith.constant 0 : index
      %18 = vector.load %arg3[%c0_10, %c0_11] : memref<1x1xf32, #tpu.memory_space<vmem>>, vector<1x1xf32>
      %cst_12 = arith.constant 0.0833333358 : f32
      %19 = vector.broadcast %cst_12 : f32 to vector<1x1xf32>
      %20 = arith.mulf %18, %19 : vector<1x1xf32>
      %c0_13 = arith.constant 0 : index
      %c0_14 = arith.constant 0 : index
      %21 = vector.load %arg3[%c0_13, %c0_14] : memref<1x1xf32, #tpu.memory_space<vmem>>, vector<1x1xf32>
      tpu.vector_store %arg3[%c0_13, %c0_14], %20 {strides = array<i32>} : memref<1x1xf32, #tpu.memory_space<vmem>>, vector<1x1xf32>,
    } else {
    }
    return
  }
  func.func @transform_0(%arg0: i32) -> (i32, i32) {
    %c0_i32 = arith.constant 0 : i32
    %c0_i32_0 = arith.constant 0 : i32
    return %arg0, %c0_i32 : i32, i32
  }
  func.func @transform_1(%arg0: i32) -> (i32, i32) {
    %c0_i32 = arith.constant 0 : i32
    %c0_i32_0 = arith.constant 0 : i32
    return %arg0, %c0_i32 : i32, i32
  }
  func.func @transform_2(%arg0: i32) -> (i32, i32) {
    %c0_i32 = arith.constant 0 : i32
    %c0_i32_0 = arith.constant 0 : i32
    %c0_i32_1 = arith.constant 0 : i32
    return %c0_i32, %c0_i32_0 : i32, i32
  }
}

</mosaic_0001>

<llo_original>
// kernel: tpu_custom_call.1
$region0: #{tpu_custom_call.1}
  #allocation0 [shape = 'u32[]', space=smem, size = 0x4, offset = 0x4, fixed_abs, tag = 'smem constant byte address 0x4 - core index']
  #allocation1 [shape = 'u32[144,128]{1,0:T(1,128)}', space=vmem, size = 0x12000, scoped, tag = 'internal scratch']
  %s0 = inlined_call_operand.hbm [shape: f32[8,128], index: 0, kind: input, shape index: {}]
  %s1 = inlined_call_operand.hbm [shape: f32[8,128], index: 1, kind: input, shape index: {}]
  %s2 = inlined_call_operand.hbm [shape: f32[1,1], index: 2, kind: output, shape index: {}]
  %s3 = sld [smem:[#allocation0]]
  $region34: #{tpu_custom_call.1} parent=0
    _
  %s5 = ssub.s32 1, %s3
  %s6 = scalar_select 0, %s5, %s3
  $region1: #{tpu_custom_call.1} parent=0
    #allocation2 [shape = 'u8[4096]{0}', space=vmem, size = 0x1000, scoped, tag = 'input window, operand 0, single buffered']
    #allocation3 [shape = 's32[1]{0}', space=sflag, size = 0x4, scoped, tag = 'scoped memory for tpu_custom_call.1']
    #allocation4 [shape = 's32[1]{0}', space=sflag, size = 0x4, scoped, tag = 'scoped memory for tpu_custom_call.1']
    #allocation5 [shape = 'u8[4096]{0}', space=vmem, size = 0x1000, scoped, tag = 'input window, operand 1, single buffered']
    #allocation6 [shape = 's32[1]{0}', space=sflag, size = 0x4, scoped, tag = 'scoped memory for tpu_custom_call.1']
    #allocation7 [shape = 'u8[512]{0}', space=vmem, size = 0x400, scoped, tag = 'output window, operand 0, single buffered']
    %7 = vsyncpa [#allocation3], 0
    %8 = vsyncpa [#allocation6], 0
    %9 = vsyncpa [#allocation4], 0
    // Predicated region
    $region2: #{tpu_custom_call.1} parent=1 // pred_check
      _
    $region3: #{tpu_custom_call.1} parent=1 // pred_check_branch
      %11 = sbr.rel (0) target = $region5
    $region4: #{tpu_custom_call.1} parent=1 // pred_region
      %s13 = ssub.s32 128, 128
      %14 = vsyncadd [#allocation3], %s13
      %s16 = sshll.u32 [#allocation2], 4
      %s17 = int_to_ptr.vmem [resolvable:$true] %s16
      %19 = dma.hbm_to_vmem [thread:$0]  %s0, 128, %s17, [#allocation3]
    $region5: #{tpu_custom_call.1} parent=1 // pred_fallthru
      _
    // Predicated region
    $region6: #{tpu_custom_call.1} parent=1 // pred_check
      _
    $region7: #{tpu_custom_call.1} parent=1 // pred_check_branch
      %21 = sbr.rel (0) target = $region9
    $region8: #{tpu_custom_call.1} parent=1 // pred_region
      %s23 = ssub.s32 128, 128
      %24 = vsyncadd [#allocation6], %s23
      %s26 = sshll.u32 [#allocation5], 4
      %s27 = int_to_ptr.vmem [resolvable:$true] %s26
      %29 = dma.hbm_to_vmem [thread:$0]  %s1, 128, %s27, [#allocation6]
    $region9: #{tpu_custom_call.1} parent=1 // pred_fallthru
      _
    // Predicated region
    $region10: #{tpu_custom_call.1} parent=1 // pred_check
      _
    $region11: #{tpu_custom_call.1} parent=1 // pred_check_branch
      %31 = sbr.rel (0) target = $region13
    $region12: #{tpu_custom_call.1} parent=1 // pred_region
      %32 = dma.done [#allocation3], 128
    $region13: #{tpu_custom_call.1} parent=1 // pred_fallthru
      _
    // Predicated region
    $region14: #{tpu_custom_call.1} parent=1 // pred_check
      _
    $region15: #{tpu_custom_call.1} parent=1 // pred_check_branch
      %34 = sbr.rel (0) target = $region17
    $region16: #{tpu_custom_call.1} parent=1 // pred_region
      %35 = dma.done [#allocation6], 128
    $region17: #{tpu_custom_call.1} parent=1 // pred_fallthru
      _
    %p36 = scmp.eq.s32.totalorder 0, 0
    // Predicated region
    $region18: #{tpu_custom_call.1} parent=1 // pred_check
      %p37 = pneg %p36
    $region19: #{tpu_custom_call.1} parent=1 // pred_check_branch
      %39 = sbr.rel (%p37) target = $region21
    $region20: #{tpu_custom_call.1} parent=1 // pred_region
      %vm40 = vcmask 0
      %41 = vst.msk [vmem:[#allocation7] sm:$0x1] %vm40, 0.0
    $region21: #{tpu_custom_call.1} parent=1 // pred_fallthru
      _
    %v42 = vld [vmem:[#allocation2] sm:$0xff]
    %v43 = vld [vmem:[#allocation5] sm:$0xff]
    %v44 = vsub.f32 %v42, %v43
    %v45 = vld [vmem:[#allocation7] sm:$0x1]
    %v46 = vmul.f32 %v44, %v44
    %47 = vadd.xlane.f32.xlu0 %v46
    %v48 = vpop.xlane.xlu0 %47
    %v49 = vrot.slane %v48, 4
    %v50 = vadd.f32 %v48, %v49
    %v51 = vrot.slane %v50, 2
    %v52 = vadd.f32 %v50, %v51
    %v53 = vrot.slane %v52, 1
    %v54 = vadd.f32 %v52, %v53
    %s55 = vtos %v54
    %v56 = vstv %s55
    %v57 = vadd.f32 %v45, %v56
    %vm58 = vcmask 0
    %59 = vst.msk [vmem:[#allocation7] sm:$0x1] %vm58, %v57
    // Predicated region
    $region22: #{tpu_custom_call.1} parent=1 // pred_check
      %p60 = pneg %p36
    $region23: #{tpu_custom_call.1} parent=1 // pred_check_branch
      %62 = sbr.rel (%p60) target = $region25
    $region24: #{tpu_custom_call.1} parent=1 // pred_region
      %v63 = vld [vmem:[#allocation7] sm:$0x1]
      %v64 = vmul.f32 %v63, 0.083333336
      %65 = vst.msk [vmem:[#allocation7] sm:$0x1] %vm58, %v64
    $region25: #{tpu_custom_call.1} parent=1 // pred_fallthru
      _
    // Predicated region
    $region26: #{tpu_custom_call.1} parent=1 // pred_check
      _
    $region27: #{tpu_custom_call.1} parent=1 // pred_check_branch
      %67 = sbr.rel (0) target = $region29
    $region28: #{tpu_custom_call.1} parent=1 // pred_region
      %s69 = ssub.s32 16, 16
      %70 = vsyncadd [#allocation4], %s69
      %s72 = sshll.u32 [#allocation7], 4
      %s73 = int_to_ptr.vmem [resolvable:$true] %s72
      %75 = dma.vmem_to_hbm [thread:$0]  %s73, 16, %s2, [#allocation4]
    $region29: #{tpu_custom_call.1} parent=1 // pred_fallthru
      _
    // Predicated region
    $region30: #{tpu_custom_call.1} parent=1 // pred_check
      _
    $region31: #{tpu_custom_call.1} parent=1 // pred_check_branch
      %77 = sbr.rel (0) target = $region33
    $region32: #{tpu_custom_call.1} parent=1 // pred_region
      %78 = dma.done [#allocation4], 16
    $region33: #{tpu_custom_call.1} parent=1 // pred_fallthru
      _
    %79 = vsyncpa [#allocation3], 1
    %80 = vsyncpa [#allocation6], 1
    %81 = vsyncpa [#allocation4], 1

</llo_original>
